<compile_context>
chip_gen: v7x
topology: tpu7x:2x2x1
jax: 0.10.0
libtpu: 0.0.40
codegen_flags: <defaults>
</compile_context>

<pallas_src>
import numpy as np
import jax
import jax.numpy as jnp
from jax.experimental import pallas as pl
from jax.experimental.pallas import tpu as pltpu


# ---------------------------------------------------------------------------
# Kernel: MLP  (D -> H1 -> H2 -> 1), Tanh hidden activations.
# ---------------------------------------------------------------------------
def mlp_kernel(x_ref, w1_ref, b1_ref, w2_ref, b2_ref, w3_ref, b3_ref, o_ref):
    # x_ref : (TILE_B, D)   activation stream (f32 or bf16)
    # w1_ref: (D, H1) bf16  b1_ref: (1, H1) f32     (resident across grid)
    # w2_ref: (H1, H2) bf16 b2_ref: (1, H2) f32
    # w3_ref: (1, H2) f32   final Linear weight as a row vector
    # b3_ref: (1, 1) f32
    # o_ref : (TILE_B, 1) f32
    x = x_ref[...].astype(w1_ref.dtype)          # bf16 operand -> single-pass MXU
    h1 = jnp.tanh(jnp.dot(x, w1_ref[...],
                          preferred_element_type=jnp.float32) + b1_ref[...])
    h2 = jnp.tanh(jnp.dot(h1.astype(w2_ref.dtype), w2_ref[...],
                          preferred_element_type=jnp.float32) + b2_ref[...])
    # N=1 matmul wastes a full MXU pass; do it on the VPU/XLU instead.
    o_ref[...] = jnp.sum(h2 * w3_ref[...], axis=-1, keepdims=True) + b3_ref[...]


# ---------------------------------------------------------------------------
# Tile-size selection.
# ---------------------------------------------------------------------------
def _pick_tile_b(B, sublane, tile_b_max=1024):
    """Sublane-aligned batch tile: big enough to amortize per-step overhead,
    small enough for VMEM, and (when B allows) >=2 grid steps so the parallel
    batch axis shards across both TensorCores on v7x."""
    if B <= 2 * sublane:
        return sublane * pl.cdiv(B, sublane)          # tiny batch: single tile
    half = sublane * pl.cdiv(pl.cdiv(B, 2), sublane)  # >=2 steps for megacore
    return min(tile_b_max, half)


# ---------------------------------------------------------------------------
# Pallas wrapper: gridded over batch, weights resident, ragged last block.
# ---------------------------------------------------------------------------
def _mlp_forward(x, w1, b1, w2, b2, w3, b3, tile_b_max=1024):
    B, D = x.shape
    H1 = w1.shape[1]
    H2 = w2.shape[1]

    sublane = 16 if x.dtype == jnp.bfloat16 else 8
    tile_b = _pick_tile_b(B, sublane, tile_b_max)
    grid_steps = pl.cdiv(B, tile_b)   # ragged last block handled by Pallas (no pad copy)

    w3_row = w3.reshape(1, H2).astype(jnp.float32)
    b3_mat = b3.reshape(1, 1).astype(jnp.float32)

    out = pl.pallas_call(
        mlp_kernel,
        out_shape=jax.ShapeDtypeStruct((B, 1), jnp.float32),
        grid_spec=pltpu.PrefetchScalarGridSpec(
            num_scalar_prefetch=0,
            grid=(grid_steps,),
            in_specs=[
                pl.BlockSpec((tile_b, D), lambda i: (i, 0)),   # activation stream
                pl.BlockSpec((D, H1), lambda i: (0, 0)),       # resident weights
                pl.BlockSpec((1, H1), lambda i: (0, 0)),
                pl.BlockSpec((H1, H2), lambda i: (0, 0)),
                pl.BlockSpec((1, H2), lambda i: (0, 0)),
                pl.BlockSpec((1, H2), lambda i: (0, 0)),
                pl.BlockSpec((1, 1), lambda i: (0, 0)),
            ],
            out_specs=pl.BlockSpec((tile_b, 1), lambda i: (i, 0)),
        ),
        compiler_params=pltpu.CompilerParams(
            dimension_semantics=("parallel",),   # shard batch across TensorCores
            vmem_limit_bytes=32 << 20,           # 2x1024x768 f32 tiles + weights << 32 MiB
        ),
    )(x, w1, b1, w2, b2, w3_row, b3_mat)
    return out


# ---------------------------------------------------------------------------
# One-time parameter folding: conv (+flatten) absorbed into the first Linear.
# ---------------------------------------------------------------------------
def fold_conv_into_fc(wc, bc, w1, b1, state_shape):
    """flatten(conv(x; wc, bc)) @ w1 + b1  ==  x.reshape(B,-1) @ w1_eff + b1_eff."""
    C, H, W = state_shape
    D = C * H * W
    Cout = wc.shape[0]
    # Rows of the dense conv matrix via its action on the one-hot basis
    # (C-major flatten order, identical to torch's reshape).
    eye = jnp.eye(D, dtype=jnp.float32).reshape(D, C, H, W)
    basis = jax.lax.conv_general_dilated(
        eye, wc, window_strides=(1, 1), padding="SAME",
        dimension_numbers=("NCHW", "OIHW", "NCHW"),
    ).reshape(D, Cout * H * W)                       # basis[p, q] = d out_q / d in_p
    w1_eff = basis @ w1                              # (D, H1)  f32
    b_flat = jnp.broadcast_to(bc[:, None, None], (Cout, H, W)).reshape(1, -1)
    b1_eff = b1 + b_flat @ w1                        # (1, H1)  f32
    return w1_eff, b1_eff


def state_function_forward(states, params, cnn=True, tile_b_max=1024):
    """Pallas implementation of StateFunction.forward."""
    if cnn:
        # torch: conv -> reshape((-1, state_dim)); the conv is pre-folded into
        # w1_eff/b1_eff, so the per-call path is just flatten + one MLP kernel.
        x = states.reshape(states.shape[0], -1)
        w1, b1 = params["w1_eff"], params["b1_eff"]
    else:
        x = states
        w1, b1 = params["w1_mxu"], params["b1"]
    return _mlp_forward(x, w1, b1, params["w2_mxu"], params["b2"],
                        params["w3"], params["b3"], tile_b_max=tile_b_max)


# ---------------------------------------------------------------------------
# Deterministic parameter init (PyTorch-style uniform(-1/sqrt(fan_in), ...))
# ---------------------------------------------------------------------------
def init_params(key, state_shape=(3, 16, 16), hidden_units=(64, 64)):
    C, H, W = state_shape
    state_dim = C * H * W
    ks = jax.random.split(key, 8)

    def unif(k, shape, fan_in):
        bound = 1.0 / np.sqrt(fan_in)
        return jax.random.uniform(k, shape, jnp.float32, -bound, bound)

    wc = unif(ks[0], (3, C, 3, 3), C * 9)          # OIHW
    bc = unif(ks[1], (3,), C * 9)
    w1 = unif(ks[2], (state_dim, hidden_units[0]), state_dim)
    b1 = unif(ks[3], (1, hidden_units[0]), state_dim)
    w2 = unif(ks[4], (hidden_units[0], hidden_units[1]), hidden_units[0])
    b2 = unif(ks[5], (1, hidden_units[1]), hidden_units[0])
    w3 = unif(ks[6], (hidden_units[1], 1), hidden_units[1])
    b3 = unif(ks[7], (1, 1), hidden_units[1])

    params = {
        "wc": wc, "bc": bc,
        "w1": w1, "b1": b1, "w2": w2, "b2": b2, "w3": w3, "b3": b3,
    }
    # One-time prep (not part of the per-call forward):
    #   * fold the conv into the first Linear,
    #   * cast the MXU weight operands to bf16 for single-pass matmuls.
    w1_eff, b1_eff = fold_conv_into_fc(wc, bc, w1, b1, state_shape)
    params["w1_eff"] = w1_eff.astype(jnp.bfloat16)   # kernel MXU operand
    params["b1_eff"] = b1_eff                        # bias stays f32
    params["w1_mxu"] = w1.astype(jnp.bfloat16)       # non-cnn path
    params["w2_mxu"] = w2.astype(jnp.bfloat16)
    return params


def reference_forward(states, params):
    conv = jax.lax.conv_general_dilated(
        states, params["wc"], window_strides=(1, 1), padding="SAME",
        dimension_numbers=("NCHW", "OIHW", "NCHW"),
    ) + params["bc"].reshape(1, -1, 1, 1)
    flat = conv.reshape(states.shape[0], -1)
    h1 = jnp.tanh(flat @ params["w1"] + params["b1"])
    h2 = jnp.tanh(h1 @ params["w2"] + params["b2"])
    return h2 @ params["w3"] + params["b3"]


if __name__ == "__main__":
    key = jax.random.PRNGKey(0)
    k_param, k_x = jax.random.split(key)

    B, C, H, W = 2, 3, 16, 16            # state_shape = (3, 16, 16), cnn=True
    params = init_params(k_param, state_shape=(C, H, W))
    states = jax.random.normal(k_x, (B, C, H, W), dtype=jnp.float32)

    out = state_function_forward(states, params, cnn=True)
    out = jax.block_until_ready(out)
    assert out.shape == (B, 1), out.shape

    ref = jax.block_until_ready(reference_forward(states, params))
    if not np.allclose(np.asarray(out), np.asarray(ref), rtol=2e-2, atol=2e-2):
        raise AssertionError(f"mismatch: pallas={out} ref={ref}")

    print("KERNEL_OK")
</pallas_src>

<mosaic_0001>
module attributes {stable_mosaic.version = 11 : i64} {
  func.func @mlp_kernel(%arg0: i32, %arg1: memref<8x768xf32, #tpu.memory_space<vmem>>, %arg2: memref<768x64xbf16, #tpu.memory_space<vmem>>, %arg3: memref<1x64xf32, #tpu.memory_space<vmem>>, %arg4: memref<64x64xbf16, #tpu.memory_space<vmem>>, %arg5: memref<1x64xf32, #tpu.memory_space<vmem>>, %arg6: memref<1x64xf32, #tpu.memory_space<vmem>>, %arg7: memref<1x1xf32, #tpu.memory_space<vmem>>, %arg8: memref<8x1xf32, #tpu.memory_space<vmem>>) attributes {dimension_semantics = [#tpu.dimension_semantics<parallel>], iteration_bounds = array<i64: 1>, scalar_prefetch = 0 : i64, scratch_operands = 0 : i64, tpu.core_type = #tpu.core_type<tc>, window_params = [{transform_indices = @transform_0, window_bounds = array<i64: 8, 768>}, {pipeline_mode = #tpu.pipeline_mode<synchronous>, transform_indices = @transform_1, window_bounds = array<i64: 768, 64>}, {pipeline_mode = #tpu.pipeline_mode<synchronous>, transform_indices = @transform_2, window_bounds = array<i64: 1, 64>}, {pipeline_mode = #tpu.pipeline_mode<synchronous>, transform_indices = @transform_3, window_bounds = array<i64: 64, 64>}, {pipeline_mode = #tpu.pipeline_mode<synchronous>, transform_indices = @transform_4, window_bounds = array<i64: 1, 64>}, {pipeline_mode = #tpu.pipeline_mode<synchronous>, transform_indices = @transform_5, window_bounds = array<i64: 1, 64>}, {pipeline_mode = #tpu.pipeline_mode<synchronous>, transform_indices = @transform_6, window_bounds = array<i64: 1, 1>}, {transform_indices = @transform_7, window_bounds = array<i64: 8, 1>}]} {
    %c0 = arith.constant 0 : index
    %c0_0 = arith.constant 0 : index
    %0 = vector.load %arg1[%c0, %c0_0] : memref<8x768xf32, #tpu.memory_space<vmem>>, vector<8x768xf32>
    %1 = arith.truncf %0 : vector<8x768xf32> to vector<8x768xbf16>
    %c0_1 = arith.constant 0 : index
    %c0_2 = arith.constant 0 : index
    %2 = vector.load %arg2[%c0_1, %c0_2] : memref<768x64xbf16, #tpu.memory_space<vmem>>, vector<768x64xbf16>
    %cst = arith.constant dense<0.000000e+00> : vector<8x64xf32>
    %3 = tpu.matmul %1, %2, %cst {dimension_numbers = #tpu.dot_dimension_numbers<[1], [0], [0], [1], [0, 0, 1, 1], [], []>} : vector<8x768xbf16>, vector<768x64xbf16>, vector<8x64xf32> -> vector<8x64xf32>
    %c0_3 = arith.constant 0 : index
    %c0_4 = arith.constant 0 : index
    %4 = vector.load %arg3[%c0_3, %c0_4] : memref<1x64xf32, #tpu.memory_space<vmem>>, vector<1x64xf32>
    %5 = vector.broadcast %4 : vector<1x64xf32> to vector<8x64xf32>
    %6 = arith.addf %3, %5 : vector<8x64xf32>
    %7 = math.tanh %6 : vector<8x64xf32>
    %8 = arith.truncf %7 : vector<8x64xf32> to vector<8x64xbf16>
    %c0_5 = arith.constant 0 : index
    %c0_6 = arith.constant 0 : index
    %9 = vector.load %arg4[%c0_5, %c0_6] : memref<64x64xbf16, #tpu.memory_space<vmem>>, vector<64x64xbf16>
    %cst_7 = arith.constant dense<0.000000e+00> : vector<8x64xf32>
    %10 = tpu.matmul %8, %9, %cst_7 {dimension_numbers = #tpu.dot_dimension_numbers<[1], [0], [0], [1], [0, 0, 1, 1], [], []>} : vector<8x64xbf16>, vector<64x64xbf16>, vector<8x64xf32> -> vector<8x64xf32>
    %c0_8 = arith.constant 0 : index
    %c0_9 = arith.constant 0 : index
    %11 = vector.load %arg5[%c0_8, %c0_9] : memref<1x64xf32, #tpu.memory_space<vmem>>, vector<1x64xf32>
    %12 = vector.broadcast %11 : vector<1x64xf32> to vector<8x64xf32>
    %13 = arith.addf %10, %12 : vector<8x64xf32>
    %14 = math.tanh %13 : vector<8x64xf32>
    %c0_10 = arith.constant 0 : index
    %c0_11 = arith.constant 0 : index
    %15 = vector.load %arg6[%c0_10, %c0_11] : memref<1x64xf32, #tpu.memory_space<vmem>>, vector<1x64xf32>
    %16 = vector.broadcast %15 : vector<1x64xf32> to vector<8x64xf32>
    %17 = arith.mulf %14, %16 : vector<8x64xf32>
    %cst_12 = arith.constant dense<0.000000e+00> : vector<8xf32>
    %18 = vector.multi_reduction <add>, %17, %cst_12 [1] : vector<8x64xf32> to vector<8xf32>
    %19 = vector.shape_cast %18 : vector<8xf32> to vector<8x1xf32>
    %c0_13 = arith.constant 0 : index
    %c0_14 = arith.constant 0 : index
    %20 = vector.load %arg7[%c0_13, %c0_14] : memref<1x1xf32, #tpu.memory_space<vmem>>, vector<1x1xf32>
    %21 = vector.broadcast %20 : vector<1x1xf32> to vector<8x1xf32>
    %22 = arith.addf %19, %21 : vector<8x1xf32>
    %c0_15 = arith.constant 0 : index
    %c0_16 = arith.constant 0 : index
    %23 = vector.load %arg8[%c0_15, %c0_16] : memref<8x1xf32, #tpu.memory_space<vmem>>, vector<8x1xf32>
    tpu.vector_store %arg8[%c0_15, %c0_16], %22 {strides = array<i32>} : memref<8x1xf32, #tpu.memory_space<vmem>>, vector<8x1xf32>,
    return
  }
  func.func @transform_0(%arg0: i32) -> (i32, i32) {
    %c0_i32 = arith.constant 0 : i32
    %c0_i32_0 = arith.constant 0 : i32
    return %arg0, %c0_i32 : i32, i32
  }
  func.func @transform_1(%arg0: i32) -> (i32, i32) {
    %c0_i32 = arith.constant 0 : i32
    %c0_i32_0 = arith.constant 0 : i32
    %c0_i32_1 = arith.constant 0 : i32
    return %c0_i32, %c0_i32_0 : i32, i32
  }
  func.func @transform_2(%arg0: i32) -> (i32, i32) {
    %c0_i32 = arith.constant 0 : i32
    %c0_i32_0 = arith.constant 0 : i32
    %c0_i32_1 = arith.constant 0 : i32
    return %c0_i32, %c0_i32_0 : i32, i32
  }
  func.func @transform_3(%arg0: i32) -> (i32, i32) {
    %c0_i32 = arith.constant 0 : i32
    %c0_i32_0 = arith.constant 0 : i32
    %c0_i32_1 = arith.constant 0 : i32
    return %c0_i32, %c0_i32_0 : i32, i32
  }
  func.func @transform_4(%arg0: i32) -> (i32, i32) {
    %c0_i32 = arith.constant 0 : i32
    %c0_i32_0 = arith.constant 0 : i32
    %c0_i32_1 = arith.constant 0 : i32
    return %c0_i32, %c0_i32_0 : i32, i32
  }
  func.func @transform_5(%arg0: i32) -> (i32, i32) {
    %c0_i32 = arith.constant 0 : i32
    %c0_i32_0 = arith.constant 0 : i32
    %c0_i32_1 = arith.constant 0 : i32
    return %c0_i32, %c0_i32_0 : i32, i32
  }
  func.func @transform_6(%arg0: i32) -> (i32, i32) {
    %c0_i32 = arith.constant 0 : i32
    %c0_i32_0 = arith.constant 0 : i32
    %c0_i32_1 = arith.constant 0 : i32
    return %c0_i32, %c0_i32_0 : i32, i32
  }
  func.func @transform_7(%arg0: i32) -> (i32, i32) {
    %c0_i32 = arith.constant 0 : i32
    %c0_i32_0 = arith.constant 0 : i32
    return %arg0, %c0_i32 : i32, i32
  }
}

</mosaic_0001>

<llo_original>
// kernel: tpu_custom_call.1
$region0: #{tpu_custom_call.1}
  #allocation0 [shape = 'u32[]', space=smem, size = 0x4, offset = 0x4, fixed_abs, tag = 'smem constant byte address 0x4 - core index']
  #allocation1 [shape = 'u32[144,128]{1,0:T(1,128)}', space=vmem, size = 0x12000, scoped, tag = 'internal scratch']
  #allocation2 [shape = 'f32[1,1]{1,0:T(1,128)S(1)}', space=vmem, size = 0x200, scoped, tag = 'scoped memory for tpu_custom_call.1']
  %s0 = inlined_call_operand.vmem [shape: f32[2,768], index: 0, kind: input, shape index: {}]
  %s1 = inlined_call_operand.vmem [shape: bf16[768,64], index: 1, kind: input, shape index: {}]
  %s2 = inlined_call_operand.vmem [shape: f32[1,64], index: 2, kind: input, shape index: {}]
  %s3 = inlined_call_operand.vmem [shape: bf16[64,64], index: 3, kind: input, shape index: {}]
  %s4 = inlined_call_operand.vmem [shape: f32[1,64], index: 4, kind: input, shape index: {}]
  %s5 = inlined_call_operand.vmem [shape: f32[1,64], index: 5, kind: input, shape index: {}]
  %s6 = inlined_call_operand.<no memory space> [shape: f32[1,1], index: 6, kind: input, shape index: {}]
  %s7 = inlined_call_operand.vmem [shape: f32[2,1], index: 7, kind: output, shape index: {}]
  %s8 = sld [smem:[#allocation0]]
  $region68: #{tpu_custom_call.1} parent=0
    _
  %s10 = ssub.s32 1, %s8
  %s11 = scalar_select 0, %s10, %s8
  %v12 = vstv %s6
  %13 = vst [vmem:[#allocation2] sm:$0x1] %v12
  $region1: #{tpu_custom_call.1} parent=0
    #allocation3 [shape = 'u8[4096]{0}', space=vmem, size = 0x1000, scoped, tag = 'output window, operand 0, single buffered']
    // Predicated region
    $region2: #{tpu_custom_call.1} parent=1 // pred_check
      _
    $region3: #{tpu_custom_call.1} parent=1 // pred_check_branch
      %15 = sbr.rel (0) target = $region5
    $region4: #{tpu_custom_call.1} parent=1 // pred_region
      _
    $region5: #{tpu_custom_call.1} parent=1 // pred_fallthru
      _
    // Predicated region
    $region6: #{tpu_custom_call.1} parent=1 // pred_check
      _
    $region7: #{tpu_custom_call.1} parent=1 // pred_check_branch
      %17 = sbr.rel (0) target = $region9
    $region8: #{tpu_custom_call.1} parent=1 // pred_region
      _
    $region9: #{tpu_custom_call.1} parent=1 // pred_fallthru
      _
    // Predicated region
    $region10: #{tpu_custom_call.1} parent=1 // pred_check
      _
    $region11: #{tpu_custom_call.1} parent=1 // pred_check_branch
      %19 = sbr.rel (0) target = $region13
    $region12: #{tpu_custom_call.1} parent=1 // pred_region
      _
    $region13: #{tpu_custom_call.1} parent=1 // pred_fallthru
      _
    // Predicated region
    $region14: #{tpu_custom_call.1} parent=1 // pred_check
      _
    $region15: #{tpu_custom_call.1} parent=1 // pred_check_branch
      %21 = sbr.rel (0) target = $region17
    $region16: #{tpu_custom_call.1} parent=1 // pred_region
      _
    $region17: #{tpu_custom_call.1} parent=1 // pred_fallthru
      _
    // Predicated region
    $region18: #{tpu_custom_call.1} parent=1 // pred_check
      _
    $region19: #{tpu_custom_call.1} parent=1 // pred_check_branch
      %23 = sbr.rel (0) target = $region21
    $region20: #{tpu_custom_call.1} parent=1 // pred_region
      _
    $region21: #{tpu_custom_call.1} parent=1 // pred_fallthru
      _
    // Predicated region
    $region22: #{tpu_custom_call.1} parent=1 // pred_check
      _
    $region23: #{tpu_custom_call.1} parent=1 // pred_check_branch
      %25 = sbr.rel (0) target = $region25
    $region24: #{tpu_custom_call.1} parent=1 // pred_region
      _
    $region25: #{tpu_custom_call.1} parent=1 // pred_fallthru
      _
    // Predicated region
    $region26: #{tpu_custom_call.1} parent=1 // pred_check
      _
    $region27: #{tpu_custom_call.1} parent=1 // pred_check_branch
      %27 = sbr.rel (0) target = $region29
    $region28: #{tpu_custom_call.1} parent=1 // pred_region
      _
    $region29: #{tpu_custom_call.1} parent=1 // pred_fallthru
      _
    %v29 = vld [vmem:[%s0] sm:$0xff]
    %v30 = vld [vmem:[%s0 + $0x8] sm:$0xf]
    %v31 = vld [vmem:[%s0 + $0xc] sm:$0xff]
    %v32 = vld [vmem:[%s0 + $0x14] sm:$0xf]
    %v33 = vld [vmem:[%s0 + $0x18] sm:$0xff]
    %v34 = vld [vmem:[%s0 + $0x20] sm:$0xf]
    %v35 = vld [vmem:[%s0 + $0x24] sm:$0xff]
    %v36 = vld [vmem:[%s0 + $0x2c] sm:$0xf]
    %v45 = vcombine.low %v29, %v31
    %v46 = vcombine.high %v29, %v31
    %v47 = vcombine.low %v33, %v35
    %v48 = vcombine.high %v33, %v35
    %v50 = vunpack.c.l.s4 1983009808
    %v51 = vunpack.c.0.s8 %v50
    %v52 = vlaneseq
    %v53 = vshrl.u32 %v52, 7
    %v54 = vsub.s32 %v51, %v53
    %v55 = vrot.slane %v45, %v54
    %v57 = vunpack.c.l.s4 1983009808
    %v58 = vunpack.c.0.s8 %v57
    %v59 = vlaneseq
    %v60 = vshrl.u32 %v59, 7
    %v61 = vsub.s32 %v58, %v60
    %v62 = vrot.slane %v46, %v61
    %v64 = vunpack.c.l.s4 1983009808
    %v65 = vunpack.c.0.s8 %v64
    %v66 = vlaneseq
    %v67 = vshrl.u32 %v66, 7
    %v68 = vsub.s32 %v65, %v67
    %v69 = vrot.slane %v47, %v68
    %v71 = vunpack.c.l.s4 1983009808
    %v72 = vunpack.c.0.s8 %v71
    %v73 = vlaneseq
    %v74 = vshrl.u32 %v73, 7
    %v75 = vsub.s32 %v72, %v74
    %v76 = vrot.slane %v48, %v75
    %v77 = vcombine.low %v55, %v69
    %v78 = vcombine.high %v55, %v69
    %v79 = vcombine.low %v62, %v76
    %v80 = vcombine.high %v62, %v76
    %v81 = vcombine.low %v30, %v32
    %v82 = vcombine.low %v34, %v36
    %v84 = vunpack.c.l.s4 1983009808
    %v85 = vunpack.c.0.s8 %v84
    %v86 = vlaneseq
    %v87 = vshrl.u32 %v86, 7
    %v88 = vsub.s32 %v85, %v87
    %v89 = vrot.slane %v81, %v88
    %v91 = vunpack.c.l.s4 1983009808
    %v92 = vunpack.c.0.s8 %v91
    %v93 = vlaneseq
    %v94 = vshrl.u32 %v93, 7
    %v95 = vsub.s32 %v92, %v94
    %v96 = vrot.slane %v82, %v95
    %v97 = vcombine.low %v89, %v96
    %v98 = vcombine.high %v89, %v96
    %v105 = vpack.c.bf16 %v77, %v77
    %v106 = vpack.c.bf16 %v78, %v78
    %v107 = vpack.c.bf16 %v79, %v79
    %v108 = vpack.c.bf16 %v80, %v80
    %v109 = vpack.c.bf16 %v97, %v97
    %v110 = vpack.c.bf16 %v98, %v98
    %v111 = vld [vmem:[%s1] sm:$0xf]
    %v112 = vld [vmem:[%s1 + $0x4] sm:$0xf]
    %v113 = vld [vmem:[%s1 + $0x8] sm:$0xf]
    %v114 = vld [vmem:[%s1 + $0xc] sm:$0xf]
    %v115 = vld [vmem:[%s1 + $0x10] sm:$0xf]
    %v116 = vld [vmem:[%s1 + $0x14] sm:$0xf]
    %v117 = vld [vmem:[%s1 + $0x18] sm:$0xf]
    %v118 = vld [vmem:[%s1 + $0x1c] sm:$0xf]
    %v119 = vld [vmem:[%s1 + $0x20] sm:$0xf]
    %v120 = vld [vmem:[%s1 + $0x24] sm:$0xf]
    %v121 = vld [vmem:[%s1 + $0x28] sm:$0xf]
    %v122 = vld [vmem:[%s1 + $0x2c] sm:$0xf]
    %v123 = vld [vmem:[%s1 + $0x30] sm:$0xf]
    %v124 = vld [vmem:[%s1 + $0x34] sm:$0xf]
    %v125 = vld [vmem:[%s1 + $0x38] sm:$0xf]
    %v126 = vld [vmem:[%s1 + $0x3c] sm:$0xf]
    %v127 = vld [vmem:[%s1 + $0x40] sm:$0xf]
    %v128 = vld [vmem:[%s1 + $0x44] sm:$0xf]
    %v129 = vld [vmem:[%s1 + $0x48] sm:$0xf]
    %v130 = vld [vmem:[%s1 + $0x4c] sm:$0xf]
    %v131 = vld [vmem:[%s1 + $0x50] sm:$0xf]
    %v132 = vld [vmem:[%s1 + $0x54] sm:$0xf]
    %v133 = vld [vmem:[%s1 + $0x58] sm:$0xf]
    %v134 = vld [vmem:[%s1 + $0x5c] sm:$0xf]
    %v135 = vld [vmem:[%s1 + $0x60] sm:$0xf]
    %v136 = vld [vmem:[%s1 + $0x64] sm:$0xf]
    %v137 = vld [vmem:[%s1 + $0x68] sm:$0xf]
    %v138 = vld [vmem:[%s1 + $0x6c] sm:$0xf]
    %v139 = vld [vmem:[%s1 + $0x70] sm:$0xf]
    %v140 = vld [vmem:[%s1 + $0x74] sm:$0xf]
    %v141 = vld [vmem:[%s1 + $0x78] sm:$0xf]
    %v142 = vld [vmem:[%s1 + $0x7c] sm:$0xf]
    %v143 = vld [vmem:[%s1 + $0x80] sm:$0xf]
    %v144 = vld [vmem:[%s1 + $0x84] sm:$0xf]
    %v145 = vld [vmem:[%s1 + $0x88] sm:$0xf]
    %v146 = vld [vmem:[%s1 + $0x8c] sm:$0xf]
    %v147 = vld [vmem:[%s1 + $0x90] sm:$0xf]
    %v148 = vld [vmem:[%s1 + $0x94] sm:$0xf]
    %v149 = vld [vmem:[%s1 + $0x98] sm:$0xf]
    %v150 = vld [vmem:[%s1 + $0x9c] sm:$0xf]
    %v151 = vld [vmem:[%s1 + $0xa0] sm:$0xf]
    %v152 = vld [vmem:[%s1 + $0xa4] sm:$0xf]
    %v153 = vld [vmem:[%s1 + $0xa8] sm:$0xf]
    %v154 = vld [vmem:[%s1 + $0xac] sm:$0xf]
    %v155 = vld [vmem:[%s1 + $0xb0] sm:$0xf]
    %v156 = vld [vmem:[%s1 + $0xb4] sm:$0xf]
    %v157 = vld [vmem:[%s1 + $0xb8] sm:$0xf]
    %v158 = vld [vmem:[%s1 + $0xbc] sm:$0xf]
    %v159 = vld [vmem:[%s1 + $0xc0] sm:$0xf]
    %v160 = vld [vmem:[%s1 + $0xc4] sm:$0xf]
    %v161 = vld [vmem:[%s1 + $0xc8] sm:$0xf]
    %v162 = vld [vmem:[%s1 + $0xcc] sm:$0xf]
    %v163 = vld [vmem:[%s1 + $0xd0] sm:$0xf]
    %v164 = vld [vmem:[%s1 + $0xd4] sm:$0xf]
    %v165 = vld [vmem:[%s1 + $0xd8] sm:$0xf]
    %v166 = vld [vmem:[%s1 + $0xdc] sm:$0xf]
    %v167 = vld [vmem:[%s1 + $0xe0] sm:$0xf]
    %v168 = vld [vmem:[%s1 + $0xe4] sm:$0xf]
    %v169 = vld [vmem:[%s1 + $0xe8] sm:$0xf]
    %v170 = vld [vmem:[%s1 + $0xec] sm:$0xf]
    %v171 = vld [vmem:[%s1 + $0xf0] sm:$0xf]
    %v172 = vld [vmem:[%s1 + $0xf4] sm:$0xf]
    %v173 = vld [vmem:[%s1 + $0xf8] sm:$0xf]
    %v174 = vld [vmem:[%s1 + $0xfc] sm:$0xf]
    %v175 = vld [vmem:[%s1 + $0x100] sm:$0xf]
    %v176 = vld [vmem:[%s1 + $0x104] sm:$0xf]
    %v177 = vld [vmem:[%s1 + $0x108] sm:$0xf]
    %v178 = vld [vmem:[%s1 + $0x10c] sm:$0xf]
    %v179 = vld [vmem:[%s1 + $0x110] sm:$0xf]
    %v180 = vld [vmem:[%s1 + $0x114] sm:$0xf]
    %v181 = vld [vmem:[%s1 + $0x118] sm:$0xf]
    %v182 = vld [vmem:[%s1 + $0x11c] sm:$0xf]
    %v183 = vld [vmem:[%s1 + $0x120] sm:$0xf]
    %v184 = vld [vmem:[%s1 + $0x124] sm:$0xf]
    %v185 = vld [vmem:[%s1 + $0x128] sm:$0xf]
    %v186 = vld [vmem:[%s1 + $0x12c] sm:$0xf]
    %v187 = vld [vmem:[%s1 + $0x130] sm:$0xf]
    %v188 = vld [vmem:[%s1 + $0x134] sm:$0xf]
    %v189 = vld [vmem:[%s1 + $0x138] sm:$0xf]
    %v190 = vld [vmem:[%s1 + $0x13c] sm:$0xf]
    %v191 = vld [vmem:[%s1 + $0x140] sm:$0xf]
    %v192 = vld [vmem:[%s1 + $0x144] sm:$0xf]
    %v193 = vld [vmem:[%s1 + $0x148] sm:$0xf]
    %v194 = vld [vmem:[%s1 + $0x14c] sm:$0xf]
    %v195 = vld [vmem:[%s1 + $0x150] sm:$0xf]
    %v196 = vld [vmem:[%s1 + $0x154] sm:$0xf]
    %v197 = vld [vmem:[%s1 + $0x158] sm:$0xf]
    %v198 = vld [vmem:[%s1 + $0x15c] sm:$0xf]
    %v199 = vld [vmem:[%s1 + $0x160] sm:$0xf]
    %v200 = vld [vmem:[%s1 + $0x164] sm:$0xf]
    %v201 = vld [vmem:[%s1 + $0x168] sm:$0xf]
    %v202 = vld [vmem:[%s1 + $0x16c] sm:$0xf]
    %v203 = vld [vmem:[%s1 + $0x170] sm:$0xf]
    %v204 = vld [vmem:[%s1 + $0x174] sm:$0xf]
    %v205 = vld [vmem:[%s1 + $0x178] sm:$0xf]
    %v206 = vld [vmem:[%s1 + $0x17c] sm:$0xf]
    %v207 = vld [vmem:[%s2] sm:$0x1]
    %v209 = vlaneseq
    %v210 = vshrl.u32 %v209, 7
    %v211 = vsub.s32 0, %v210
    %v212 = vrot.slane %v207, %v211
    %v310 = vunpack.c.l.b16 %v111
    %v311 = vunpack.c.l.b16 %v112
    %v312 = vunpack.c.l.b16 %v113
    %v313 = vunpack.c.l.b16 %v114
    %v314 = vunpack.c.l.b16 %v115
    %v315 = vunpack.c.l.b16 %v116
    %v316 = vunpack.c.l.b16 %v117
    %v317 = vunpack.c.l.b16 %v118
    %v318 = vunpack.c.l.b16 %v119
    %v319 = vunpack.c.l.b16 %v120
    %v320 = vunpack.c.l.b16 %v121
    %v321 = vunpack.c.l.b16 %v122
    %v322 = vunpack.c.l.b16 %v123
    %v323 = vunpack.c.l.b16 %v124
    %v324 = vunpack.c.l.b16 %v125
    %v325 = vunpack.c.l.b16 %v126
    %v326 = vunpack.c.l.b16 %v127
    %v327 = vunpack.c.l.b16 %v128
    %v328 = vunpack.c.l.b16 %v129
    %v329 = vunpack.c.l.b16 %v130
    %v330 = vunpack.c.l.b16 %v131
    %v331 = vunpack.c.l.b16 %v132
    %v332 = vunpack.c.l.b16 %v133
    %v333 = vunpack.c.l.b16 %v134
    %v334 = vunpack.c.l.b16 %v135
    %v335 = vunpack.c.l.b16 %v136
    %v336 = vunpack.c.l.b16 %v137
    %v337 = vunpack.c.l.b16 %v138
    %v338 = vunpack.c.l.b16 %v139
    %v339 = vunpack.c.l.b16 %v140
    %v340 = vunpack.c.l.b16 %v141
    %v341 = vunpack.c.l.b16 %v142
    %v342 = vunpack.c.l.b16 %v143
    %v343 = vunpack.c.l.b16 %v144
    %v344 = vunpack.c.l.b16 %v145
    %v345 = vunpack.c.l.b16 %v146
    %v346 = vunpack.c.l.b16 %v147
    %v347 = vunpack.c.l.b16 %v148
    %v348 = vunpack.c.l.b16 %v149
    %v349 = vunpack.c.l.b16 %v150
    %v350 = vunpack.c.l.b16 %v151
    %v351 = vunpack.c.l.b16 %v152
    %v352 = vunpack.c.l.b16 %v153
    %v353 = vunpack.c.l.b16 %v154
    %v354 = vunpack.c.l.b16 %v155
    %v355 = vunpack.c.l.b16 %v156
    %v356 = vunpack.c.l.b16 %v157
    %v357 = vunpack.c.l.b16 %v158
    %v358 = vunpack.c.l.b16 %v159
    %v359 = vunpack.c.l.b16 %v160
    %v360 = vunpack.c.l.b16 %v161
    %v361 = vunpack.c.l.b16 %v162
    %v362 = vunpack.c.l.b16 %v163
    %v363 = vunpack.c.l.b16 %v164
    %v364 = vunpack.c.l.b16 %v165
    %v365 = vunpack.c.l.b16 %v166
    %v366 = vunpack.c.l.b16 %v167
    %v367 = vunpack.c.l.b16 %v168
    %v368 = vunpack.c.l.b16 %v169
    %v369 = vunpack.c.l.b16 %v170
    %v370 = vunpack.c.l.b16 %v171
    %v371 = vunpack.c.l.b16 %v172
    %v372 = vunpack.c.l.b16 %v173
    %v373 = vunpack.c.l.b16 %v174
    %v374 = vunpack.c.l.b16 %v175
    %v375 = vunpack.c.l.b16 %v176
    %v376 = vunpack.c.l.b16 %v177
    %v377 = vunpack.c.l.b16 %v178
    %v378 = vunpack.c.l.b16 %v179
    %v379 = vunpack.c.l.b16 %v180
    %v380 = vunpack.c.l.b16 %v181
    %v381 = vunpack.c.l.b16 %v182
    %v382 = vunpack.c.l.b16 %v183
    %v383 = vunpack.c.l.b16 %v184
    %v384 = vunpack.c.l.b16 %v185
    %v385 = vunpack.c.l.b16 %v186
    %v386 = vunpack.c.l.b16 %v187
    %v387 = vunpack.c.l.b16 %v188
    %v388 = vunpack.c.l.b16 %v189
    %v389 = vunpack.c.l.b16 %v190
    %v390 = vunpack.c.l.b16 %v191
    %v391 = vunpack.c.l.b16 %v192
    %v392 = vunpack.c.l.b16 %v193
    %v393 = vunpack.c.l.b16 %v194
    %v394 = vunpack.c.l.b16 %v195
    %v395 = vunpack.c.l.b16 %v196
    %v396 = vunpack.c.l.b16 %v197
    %v397 = vunpack.c.l.b16 %v198
    %v398 = vunpack.c.l.b16 %v199
    %v399 = vunpack.c.l.b16 %v200
    %v400 = vunpack.c.l.b16 %v201
    %v401 = vunpack.c.l.b16 %v202
    %v402 = vunpack.c.l.b16 %v203
    %v403 = vunpack.c.l.b16 %v204
    %v404 = vunpack.c.l.b16 %v205
    %v405 = vunpack.c.l.b16 %v206
    %v406 = vpack.c.b16 %v311, %v310
    %v407 = vpack.c.b16 %v313, %v312
    %v408 = vpack.c.b16 %v315, %v314
    %v409 = vpack.c.b16 %v317, %v316
    %v410 = vpack.c.b16 %v319, %v318
    %v411 = vpack.c.b16 %v321, %v320
    %v412 = vpack.c.b16 %v323, %v322
    %v413 = vpack.c.b16 %v325, %v324
    %v414 = vpack.c.b16 %v327, %v326
    %v415 = vpack.c.b16 %v329, %v328
    %v416 = vpack.c.b16 %v331, %v330
    %v417 = vpack.c.b16 %v333, %v332
    %v418 = vpack.c.b16 %v335, %v334
    %v419 = vpack.c.b16 %v337, %v336
    %v420 = vpack.c.b16 %v339, %v338
    %v421 = vpack.c.b16 %v341, %v340
    %v422 = vpack.c.b16 %v343, %v342
    %v423 = vpack.c.b16 %v345, %v344
    %v424 = vpack.c.b16 %v347, %v346
    %v425 = vpack.c.b16 %v349, %v348
    %v426 = vpack.c.b16 %v351, %v350
    %v427 = vpack.c.b16 %v353, %v352
    %v428 = vpack.c.b16 %v355, %v354
    %v429 = vpack.c.b16 %v357, %v356
    %v430 = vpack.c.b16 %v359, %v358
    %v431 = vpack.c.b16 %v361, %v360
    %v432 = vpack.c.b16 %v363, %v362
    %v433 = vpack.c.b16 %v365, %v364
    %v434 = vpack.c.b16 %v367, %v366
    %v435 = vpack.c.b16 %v369, %v368
    %v436 = vpack.c.b16 %v371, %v370
    %v437 = vpack.c.b16 %v373, %v372
    %v438 = vpack.c.b16 %v375, %v374
    %v439 = vpack.c.b16 %v377, %v376
    %v440 = vpack.c.b16 %v379, %v378
    %v441 = vpack.c.b16 %v381, %v380
    %v442 = vpack.c.b16 %v383, %v382
    %v443 = vpack.c.b16 %v385, %v384
    %v444 = vpack.c.b16 %v387, %v386
    %v445 = vpack.c.b16 %v389, %v388
    %v446 = vpack.c.b16 %v391, %v390
    %v447 = vpack.c.b16 %v393, %v392
    %v448 = vpack.c.b16 %v395, %v394
    %v449 = vpack.c.b16 %v397, %v396
    %v450 = vpack.c.b16 %v399, %v398
    %v451 = vpack.c.b16 %v401, %v400
    %v452 = vpack.c.b16 %v403, %v402
    %v453 = vpack.c.b16 %v405, %v404
    %502 = vmatprep.subr.bf16.mxu0 0
    %503 = vmatpush1.bf16.msra.mxu0 %v406
    %504 = vmatprep.subr.bf16.mxu0 0
    %505 = vmatpush1.bf16.msra.mxu0 %v407
    %506 = vmatprep.subr.bf16.mxu0 0
    %507 = vmatpush1.bf16.msra.mxu0 %v408
    %508 = vmatprep.subr.bf16.mxu0 0
    %509 = vmatpush1.bf16.msra.mxu0 %v409
    %510 = vmatprep.subr.bf16.mxu0 0
    %511 = vmatpush1.bf16.msra.mxu0 %v410
    %512 = vmatprep.subr.bf16.mxu0 0
    %513 = vmatpush1.bf16.msra.mxu0 %v411
    %514 = vmatprep.subr.bf16.mxu0 0
    %515 = vmatpush1.bf16.msra.mxu0 %v412
    %516 = vmatprep.subr.bf16.mxu0 0
    %517 = vmatpush1.bf16.msra.mxu0 %v413
    %518 = vmatprep.subr.bf16.mxu0 0
    %519 = vmatpush1.bf16.msra.mxu0 %v414
    %520 = vmatprep.subr.bf16.mxu0 0
    %521 = vmatpush1.bf16.msra.mxu0 %v415
    %522 = vmatprep.subr.bf16.mxu0 0
    %523 = vmatpush1.bf16.msra.mxu0 %v416
    %524 = vmatprep.subr.bf16.mxu0 0
    %525 = vmatpush1.bf16.msra.mxu0 %v417
    %526 = vmatprep.subr.bf16.mxu0 0
    %527 = vmatpush1.bf16.msra.mxu0 %v418
    %528 = vmatprep.subr.bf16.mxu0 0
    %529 = vmatpush1.bf16.msra.mxu0 %v419
    %530 = vmatprep.subr.bf16.mxu0 0
    %531 = vmatpush1.bf16.msra.mxu0 %v420
    %532 = vmatprep.subr.bf16.mxu0 0
    %533 = vmatpush1.bf16.msra.mxu0 %v421
    %534 = vmatprep.mubr.bf16.mxu0 %v106
    %535 = vmatmul.mubr.bf16.gmra.mrb[0].mxu0 %v105
    %v536 = vpop.f32.mrb[0].mxu0
    %v537 = vadd.f32 %v212, %v536
    %v538 = vpop.f32.mrb[0].mxu0
    %v539 = vpop.f32.mrb[0].mxu0
    %v540 = vpop.f32.mrb[0].mxu0
    %541 = vdwg.mxu0
    %542 = vmatprep.subr.bf16.mxu0 0
    %543 = vmatpush1.bf16.msra.mxu0 %v422
    %544 = vmatprep.subr.bf16.mxu0 0
    %545 = vmatpush1.bf16.msra.mxu0 %v423
    %546 = vmatprep.subr.bf16.mxu0 0
    %547 = vmatpush1.bf16.msra.mxu0 %v424
    %548 = vmatprep.subr.bf16.mxu0 0
    %549 = vmatpush1.bf16.msra.mxu0 %v425
    %550 = vmatprep.subr.bf16.mxu0 0
    %551 = vmatpush1.bf16.msra.mxu0 %v426
    %552 = vmatprep.subr.bf16.mxu0 0
    %553 = vmatpush1.bf16.msra.mxu0 %v427
    %554 = vmatprep.subr.bf16.mxu0 0
    %555 = vmatpush1.bf16.msra.mxu0 %v428
    %556 = vmatprep.subr.bf16.mxu0 0
    %557 = vmatpush1.bf16.msra.mxu0 %v429
    %558 = vmatprep.subr.bf16.mxu0 0
    %559 = vmatpush1.bf16.msra.mxu0 %v430
    %560 = vmatprep.subr.bf16.mxu0 0
    %561 = vmatpush1.bf16.msra.mxu0 %v431
    %562 = vmatprep.subr.bf16.mxu0 0
    %563 = vmatpush1.bf16.msra.mxu0 %v432
    %564 = vmatprep.subr.bf16.mxu0 0
    %565 = vmatpush1.bf16.msra.mxu0 %v433
    %566 = vmatprep.subr.bf16.mxu0 0
    %567 = vmatpush1.bf16.msra.mxu0 %v434
    %568 = vmatprep.subr.bf16.mxu0 0
    %569 = vmatpush1.bf16.msra.mxu0 %v435
    %570 = vmatprep.subr.bf16.mxu0 0
    %571 = vmatpush1.bf16.msra.mxu0 %v436
    %572 = vmatprep.subr.bf16.mxu0 0
    %573 = vmatpush1.bf16.msra.mxu0 %v437
    %574 = vmatprep.mubr.bf16.mxu0 %v108
    %575 = vmatmul.mubr.bf16.gmra.mrb[0].mxu0 %v107
    %v576 = vpop.f32.mrb[0].mxu0
    %v577 = vadd.f32 %v537, %v576
    %v578 = vpop.f32.mrb[0].mxu0
    %v579 = vpop.f32.mrb[0].mxu0
    %v580 = vpop.f32.mrb[0].mxu0
    %581 = vdwg.mxu0
    %582 = vmatprep.subr.bf16.mxu0 0
    %583 = vmatpush1.bf16.msra.mxu0 %v438
    %584 = vmatprep.subr.bf16.mxu0 0
    %585 = vmatpush1.bf16.msra.mxu0 %v439
    %586 = vmatprep.subr.bf16.mxu0 0
    %587 = vmatpush1.bf16.msra.mxu0 %v440
    %588 = vmatprep.subr.bf16.mxu0 0
    %589 = vmatpush1.bf16.msra.mxu0 %v441
    %590 = vmatprep.subr.bf16.mxu0 0
    %591 = vmatpush1.bf16.msra.mxu0 %v442
    %592 = vmatprep.subr.bf16.mxu0 0
    %593 = vmatpush1.bf16.msra.mxu0 %v443
    %594 = vmatprep.subr.bf16.mxu0 0
    %595 = vmatpush1.bf16.msra.mxu0 %v444
    %596 = vmatprep.subr.bf16.mxu0 0
    %597 = vmatpush1.bf16.msra.mxu0 %v445
    %598 = vmatprep.subr.bf16.mxu0 0
    %599 = vmatpush1.bf16.msra.mxu0 %v446
    %600 = vmatprep.subr.bf16.mxu0 0
    %601 = vmatpush1.bf16.msra.mxu0 %v447
    %602 = vmatprep.subr.bf16.mxu0 0
    %603 = vmatpush1.bf16.msra.mxu0 %v448
    %604 = vmatprep.subr.bf16.mxu0 0
    %605 = vmatpush1.bf16.msra.mxu0 %v449
    %606 = vmatprep.subr.bf16.mxu0 0
    %607 = vmatpush1.bf16.msra.mxu0 %v450
    %608 = vmatprep.subr.bf16.mxu0 0
    %609 = vmatpush1.bf16.msra.mxu0 %v451
    %610 = vmatprep.subr.bf16.mxu0 0
    %611 = vmatpush1.bf16.msra.mxu0 %v452
    %612 = vmatprep.subr.bf16.mxu0 0
    %613 = vmatpush1.bf16.msra.mxu0 %v453
    %614 = vmatprep.mubr.bf16.mxu0 %v110
    %615 = vmatmul.mubr.bf16.gmra.mrb[0].mxu0 %v109
    %v616 = vpop.f32.mrb[0].mxu0
    %v617 = vadd.f32 %v577, %v616
    %v618 = vpop.f32.mrb[0].mxu0
    %v619 = vpop.f32.mrb[0].mxu0
    %v620 = vpop.f32.mrb[0].mxu0
    %621 = vdwg.mxu0
    %v622 = vtanh.pop %v617
    %v623 = vpack.c.bf16 %v622, %v622
    %v624 = vld [vmem:[%s3] sm:$0xf]
    %v625 = vld [vmem:[%s3 + $0x4] sm:$0xf]
    %v626 = vld [vmem:[%s3 + $0x8] sm:$0xf]
    %v627 = vld [vmem:[%s3 + $0xc] sm:$0xf]
    %v628 = vld [vmem:[%s3 + $0x10] sm:$0xf]
    %v629 = vld [vmem:[%s3 + $0x14] sm:$0xf]
    %v630 = vld [vmem:[%s3 + $0x18] sm:$0xf]
    %v631 = vld [vmem:[%s3 + $0x1c] sm:$0xf]
    %v632 = vld [vmem:[%s4] sm:$0x1]
    %v634 = vlaneseq
    %v635 = vshrl.u32 %v634, 7
    %v636 = vsub.s32 0, %v635
    %v637 = vrot.slane %v632, %v636
    %v647 = vunpack.c.l.b16 %v624
    %v648 = vunpack.c.l.b16 %v625
    %v649 = vunpack.c.l.b16 %v626
    %v650 = vunpack.c.l.b16 %v627
    %v651 = vunpack.c.l.b16 %v628
    %v652 = vunpack.c.l.b16 %v629
    %v653 = vunpack.c.l.b16 %v630
    %v654 = vunpack.c.l.b16 %v631
    %v655 = vpack.c.b16 %v648, %v647
    %v656 = vpack.c.b16 %v650, %v649
    %v657 = vpack.c.b16 %v652, %v651
    %v658 = vpack.c.b16 %v654, %v653
    %vm663 = vcmask 523264
    %v665 = vsel %vm663, %v623, 0
    %667 = vmatprep.subr.bf16.mxu0 0
    %668 = vmatpush1.bf16.msra.mxu0 %v655
    %669 = vmatprep.subr.bf16.mxu0 0
    %670 = vmatpush1.bf16.msra.mxu0 %v656
    %671 = vmatprep.subr.bf16.mxu0 0
    %672 = vmatpush1.bf16.msra.mxu0 %v657
    %673 = vmatprep.subr.bf16.mxu0 0
    %674 = vmatpush1.bf16.msra.mxu0 %v658
    %675 = vmatprep.subr.bf16.mxu0 0
    %676 = vmatpush1.bf16.msra.mxu0 0
    %677 = vmatprep.subr.bf16.mxu0 0
    %678 = vmatpush1.bf16.msra.mxu0 0
    %679 = vmatprep.subr.bf16.mxu0 0
    %680 = vmatpush1.bf16.msra.mxu0 0
    %681 = vmatprep.subr.bf16.mxu0 0
    %682 = vmatpush1.bf16.msra.mxu0 0
    %683 = vmatprep.subr.bf16.mxu0 0
    %684 = vmatpush1.bf16.msra.mxu0 0
    %685 = vmatprep.subr.bf16.mxu0 0
    %686 = vmatpush1.bf16.msra.mxu0 0
    %687 = vmatprep.subr.bf16.mxu0 0
    %688 = vmatpush1.bf16.msra.mxu0 0
    %689 = vmatprep.subr.bf16.mxu0 0
    %690 = vmatpush1.bf16.msra.mxu0 0
    %691 = vmatprep.subr.bf16.mxu0 0
    %692 = vmatpush1.bf16.msra.mxu0 0
    %693 = vmatprep.subr.bf16.mxu0 0
    %694 = vmatpush1.bf16.msra.mxu0 0
    %695 = vmatprep.subr.bf16.mxu0 0
    %696 = vmatpush1.bf16.msra.mxu0 0
    %697 = vmatprep.subr.bf16.mxu0 0
    %698 = vmatpush1.bf16.msra.mxu0 0
    %699 = vmatprep.mubr.bf16.mxu0 0
    %700 = vmatmul.mubr.bf16.gmra.mrb[0].mxu0 %v665
    %v701 = vpop.f32.mrb[0].mxu0
    %v702 = vadd.f32 %v637, %v701
    %v703 = vpop.f32.mrb[0].mxu0
    %v704 = vpop.f32.mrb[0].mxu0
    %v705 = vpop.f32.mrb[0].mxu0
    %706 = vdwg.mxu0
    %v707 = vtanh.pop %v702
    %v708 = vld [vmem:[%s5] sm:$0x1]
    %v710 = vlaneseq
    %v711 = vshrl.u32 %v710, 7
    %v712 = vsub.s32 0, %v711
    %v713 = vrot.slane %v708, %v712
    %v715 = vmul.f32 %v707, %v713
    %v716 = vsel %vm663, %v715, 0.0
    %717 = vadd.xlane.f32.xlu0 %v716
    %v718 = vpop.xlane.xlu0 %717
    %v719 = vld [vmem:[#allocation2] sm:$0x1]
    %v721 = vlaneseq
    %v722 = vshrl.u32 %v721, 7
    %v723 = vsub.s32 0, %v722
    %v724 = vrot.slane %v719, %v723
    %v726 = vadd.f32 %v718, %v724
    %vm727 = vcmask 7168
    %728 = vst.msk [vmem:[#allocation3] sm:$0xff] %vm727, %v726
    // Predicated region
    $region30: #{tpu_custom_call.1} parent=1 // pred_check
      _
    $region31: #{tpu_custom_call.1} parent=1 // pred_check_branch
      %730 = sbr.rel (0) target = $region33
    $region32: #{tpu_custom_call.1} parent=1 // pred_region
      // Predicated region
      $region34: #{tpu_custom_call.1} parent=32 // pred_check
        _
      $region35: #{tpu_custom_call.1} parent=32 // pred_check_branch
        %732 = sbr.rel (0) target = $region37
      $region36: #{tpu_custom_call.1} parent=32 // pred_region
        // Predicated region
        $region38: #{tpu_custom_call.1} parent=36 // pred_check
          _
        $region39: #{tpu_custom_call.1} parent=36 // pred_check_branch
          %734 = sbr.rel target = $region41
        $region40: #{tpu_custom_call.1} parent=36 // pred_region
          // Predicated region
          $region53: #{tpu_custom_call.1} parent=40 // pred_check
            _
          $region54: #{tpu_custom_call.1} parent=40 // pred_check_branch
            %749 = sbr.rel (0) target = $region56
          $region55: #{tpu_custom_call.1} parent=40 // pred_region
            loop: start=0, step=1, limit=1
            $region57: #{tpu_custom_call.1} parent=55 // loop_pre_header
              _
            $region58: #{tpu_custom_call.1} parent=55 // loop_header
              %s752 = sphi 0, %s756
              %p753 = scmp.ge.s32.totalorder %s752, 1
              %s757 = sphi [#allocation3], [#allocation3]
              %s758 = sphi %s7, %s7
            $region59: #{tpu_custom_call.1} parent=55 // loop_header_branch
              %755 = sbr.rel (%p753) target = $region63
            $region60: #{tpu_custom_call.1} parent=55 // loop_body
              %v759 = vld [vmem:[%s757] sm:$0x3]
              %760 = vst [vmem:[%s758] sm:$0x3] %v759
            $region61: #{tpu_custom_call.1} parent=55 // loop_footer
              %s756 = sadd.s32 1, %s752
            $region62: #{tpu_custom_call.1} parent=55 // loop_footer_branch
              %751 = sbr.rel target = $region58
            $region63: #{tpu_custom_call.1} parent=55 // loop_exit
              _
          $region56: #{tpu_custom_call.1} parent=40 // pred_fallthru
            _
        $region41: #{tpu_custom_call.1} parent=36 // pred_fallthru
          _
        // Predicated region
        $region42: #{tpu_custom_call.1} parent=36 // pred_check
          _
        $region43: #{tpu_custom_call.1} parent=36 // pred_check_branch
          %736 = sbr.rel (0) target = $region45
        $region44: #{tpu_custom_call.1} parent=36 // pred_region
          loop: start=0, step=1, limit=1
          $region46: #{tpu_custom_call.1} parent=44 // loop_pre_header
            _
          $region47: #{tpu_custom_call.1} parent=44 // loop_header
            %s739 = sphi 0, %s743
            %p740 = scmp.ge.s32.totalorder %s739, 1
            %s744 = sphi [#allocation3], [#allocation3]
            %s745 = sphi %s7, %s7
          $region48: #{tpu_custom_call.1} parent=44 // loop_header_branch
            %742 = sbr.rel (%p740) target = $region52
          $region49: #{tpu_custom_call.1} parent=44 // loop_body
            %v746 = vld [vmem:[%s744] sm:$0x3]
            %747 = vst [vmem:[%s745] sm:$0x3] %v746
          $region50: #{tpu_custom_call.1} parent=44 // loop_footer
            %s743 = sadd.s32 1, %s739
          $region51: #{tpu_custom_call.1} parent=44 // loop_footer_branch
            %738 = sbr.rel target = $region47
          $region52: #{tpu_custom_call.1} parent=44 // loop_exit
            _
        $region45: #{tpu_custom_call.1} parent=36 // pred_fallthru
          _
      $region37: #{tpu_custom_call.1} parent=32 // pred_fallthru
        _
      %761 = vnop
    $region33: #{tpu_custom_call.1} parent=1 // pred_fallthru
      _
    // Predicated region
    $region64: #{tpu_custom_call.1} parent=1 // pred_check
      _
    $region65: #{tpu_custom_call.1} parent=1 // pred_check_branch
      %763 = sbr.rel (0) target = $region67
    $region66: #{tpu_custom_call.1} parent=1 // pred_region
      _
    $region67: #{tpu_custom_call.1} parent=1 // pred_fallthru
      _

</llo_original>
